<compile_context>
chip_gen: v5e
topology: v5e:2x2
jax: 0.10.0
libtpu: 0.0.40
codegen_flags: <defaults>
</compile_context>

<pallas_src>
import math

import jax
import jax.numpy as jnp
from jax.experimental import pallas as pl
from jax.experimental.pallas import tpu as pltpu


def _round_up(x, m):
    return ((x + m - 1) // m) * m


def _cdiv(a, b):
    return -(-a // b)


def _vmem_capacity_bytes():
    try:
        return int(pltpu.get_tpu_info().vmem_capacity_bytes)
    except Exception:
        return 64 * 1024 * 1024  # conservative: v7x per-TensorCore VMEM


def _choose_row_tile(M, Np, x_item, out_item, w_item, vmem_cap,
                     target_step_bytes):
    """Pick the row tile tm (multiple of 8) and return (tm, resident_bytes)."""
    # HBM traffic per row per grid step (x read + out write).
    per_row = Np * (x_item + out_item)
    # Resident operands (W^T and bias); counted double-buffered to be safe.
    resident = 2 * Np * Np * w_item + 2 * Np * 4
    avail = vmem_cap - resident
    if avail < 8 * 2 * per_row:
        # TODO(synk): K-tile the contraction (reduction grid axis + f32 VMEM
        # accumulator, "arbitrary" semantics) once resident W approaches ~half
        # of VMEM (input_size >= ~1500 on v7x's 64 MiB, ~2800 on v5e/v6e).
        raise NotImplementedError(
            "input_size too large to keep W resident in VMEM; K-tiling TODO")

    tm_target = max(8, target_step_bytes // per_row)        # ~4 MiB per step
    tm_vmem = max(8, avail // (2 * per_row))                 # double-buffered x/out
    tm = min(tm_target, tm_vmem, _round_up(M, 8))
    tm = max(8, (tm // 8) * 8)

    # Keep at least 2 grid steps on large inputs so the "parallel" axis can
    # shard across v7x's two TensorCores; then balance tiles so any masked
    # remainder block stays nearly full (no tiny trailing tile).
    num_tiles = _cdiv(M, tm)
    if num_tiles == 1 and M > 1024:
        num_tiles = 2
    tm = _round_up(_cdiv(M, num_tiles), 8)
    return tm, resident


def _imputer_kernel(x_ref, wt_ref, b_ref, o_ref):
    # y = x @ W^T + b.  wt_ref already holds (masked W)^T, i.e. a plain
    # (K, N) right operand, so the MXU is fed directly with no layout fix-up.
    y = jnp.dot(x_ref[...], wt_ref[...], preferred_element_type=jnp.float32)
    o_ref[...] = (y + b_ref[...].astype(jnp.float32)).astype(o_ref.dtype)


def imputer_regression(x2d, W, b=None, *, target_step_bytes=4 << 20):
    """x2d: (M, N), W: (N, N) in (out, in) layout, b: (N,) or None.

    Returns x2d @ diag0(W).T (+ b), matching ImputerRegression.forward.
    """
    M, N = x2d.shape
    assert W.shape == (N, N)
    out_dtype = x2d.dtype

    # --- one-time wrapper prep (hoisted out of the grid loop) ----------------
    # Exact parity with torch.diagonal(W).fill_(0): where(), not W*(1-eye),
    # so inf/NaN diagonal entries still become exactly 0.
    diag = jnp.eye(N, dtype=bool)
    W_masked = jnp.where(diag, jnp.zeros((), W.dtype), W)
    Wt = W_masked.T                      # (in, out) = (K, N); one-time transpose
    if b is None:
        b = jnp.zeros((N,), out_dtype)
    b2d = b.reshape(1, N)

    # Lane-dense last dim: pad N to a multiple of 128 (zero rows/cols are
    # harmless for the contraction; extra output columns are sliced off).
    Np = _round_up(N, 128)
    if Np != N:
        x2d = jnp.pad(x2d, ((0, 0), (0, Np - N)))
        Wt = jnp.pad(Wt, ((0, Np - N), (0, Np - N)))
        b2d = jnp.pad(b2d, ((0, 0), (0, Np - N)))

    x_item = jnp.dtype(x2d.dtype).itemsize
    w_item = jnp.dtype(Wt.dtype).itemsize
    out_item = jnp.dtype(out_dtype).itemsize

    phys_vmem = _vmem_capacity_bytes()
    vmem_cap = phys_vmem - (8 << 20)     # headroom for Mosaic internal scratch
    tm, resident = _choose_row_tile(M, Np, x_item, out_item, w_item, vmem_cap,
                                    target_step_bytes)
    grid = (_cdiv(M, tm),)

    vmem_est = resident + 2 * tm * Np * (x_item + out_item)
    vmem_limit = int(min(phys_vmem - (1 << 20),
                         max(vmem_est * 5 // 4, 32 << 20)))

    cost = pl.CostEstimate(
        flops=2 * M * Np * Np,
        transcendentals=0,
        bytes_accessed=(M * Np * x_item + Np * Np * w_item
                        + Np * out_item + M * Np * out_item),
    )

    # TODO(synk): single-buffer the constant-index operands (W^T, bias) with
    # pipeline_mode=pl.Buffered(1) once verified on the target JAX version;
    # frees Np*Np*w_item bytes of VMEM at large input_size (matters on v7x).
    # TODO(synk): on v5e at input_size >= ~1k, cast W (and optionally x) to
    # bf16 with f32 accumulation if the model tolerates it.
    out = pl.pallas_call(
        _imputer_kernel,
        out_shape=jax.ShapeDtypeStruct((M, Np), out_dtype),
        grid=grid,
        in_specs=[
            pl.BlockSpec((tm, Np), lambda i: (i, 0)),   # x row tile (pipelined)
            pl.BlockSpec((Np, Np), lambda i: (0, 0)),   # W^T, resident across steps
            pl.BlockSpec((1, Np), lambda i: (0, 0)),    # bias, resident
        ],
        out_specs=pl.BlockSpec((tm, Np), lambda i: (i, 0)),
        compiler_params=pltpu.CompilerParams(
            dimension_semantics=("parallel",),
            vmem_limit_bytes=vmem_limit,
        ),
        cost_estimate=cost,
    )(x2d, Wt, b2d)

    return out[:, :N] if Np != N else out


def imputer_regression_forward(x, W, b=None):
    """Accepts x of shape (..., input_size); returns the same shape."""
    N = x.shape[-1]
    lead = x.shape[:-1]
    x2d = x.reshape(-1, N)
    y2d = imputer_regression(x2d, W, b)
    return y2d.reshape(*lead, N)


def _init_params(key, input_size):
    """Deterministic init matching the module: xavier_uniform W, uniform bias."""
    kw, kb = jax.random.split(key)
    bound_w = math.sqrt(6.0 / (2.0 * input_size))   # fan_in = fan_out = input_size
    W = jax.random.uniform(kw, (input_size, input_size), jnp.float32,
                           minval=-bound_w, maxval=bound_w)
    stdv = 1.0 / math.sqrt(input_size)
    b = jax.random.uniform(kb, (input_size,), jnp.float32,
                           minval=-stdv, maxval=stdv)
    return W, b


if __name__ == "__main__":
    key = jax.random.PRNGKey(0)
    k_x, k_p = jax.random.split(key)

    batch, seq, input_size = 2, 8, 128
    x = jax.random.normal(k_x, (batch, seq, input_size), dtype=jnp.float32)
    W, b = _init_params(k_p, input_size)

    y = imputer_regression_forward(x, W, b)
    y = jax.block_until_ready(y)

    # Pure-JAX reference of the same semantics.
    W_zero = jnp.where(jnp.eye(input_size, dtype=bool), 0.0, W)
    y_ref = x @ W_zero.T + b
    assert y.shape == x.shape
    assert jnp.allclose(y, y_ref, atol=1e-5, rtol=1e-5), "mismatch vs reference"

    print("KERNEL_OK")
</pallas_src>

<mosaic_0001>
module attributes {stable_mosaic.version = 11 : i64} {
  func.func @_imputer_kernel(%arg0: i32, %arg1: memref<16x128xf32, #tpu.memory_space<vmem>>, %arg2: memref<128x128xf32, #tpu.memory_space<vmem>>, %arg3: memref<1x128xf32, #tpu.memory_space<vmem>>, %arg4: memref<16x128xf32, #tpu.memory_space<vmem>>) attributes {dimension_semantics = [#tpu.dimension_semantics<parallel>], iteration_bounds = array<i64: 1>, scalar_prefetch = 0 : i64, scratch_operands = 0 : i64, tpu.core_type = #tpu.core_type<tc>, window_params = [{transform_indices = @transform_0, window_bounds = array<i64: 16, 128>}, {pipeline_mode = #tpu.pipeline_mode<synchronous>, transform_indices = @transform_1, window_bounds = array<i64: 128, 128>}, {pipeline_mode = #tpu.pipeline_mode<synchronous>, transform_indices = @transform_2, window_bounds = array<i64: 1, 128>}, {transform_indices = @transform_3, window_bounds = array<i64: 16, 128>}]} {
    %c0 = arith.constant 0 : index
    %c0_0 = arith.constant 0 : index
    %0 = vector.load %arg1[%c0, %c0_0] : memref<16x128xf32, #tpu.memory_space<vmem>>, vector<16x128xf32>
    %c0_1 = arith.constant 0 : index
    %c0_2 = arith.constant 0 : index
    %1 = vector.load %arg2[%c0_1, %c0_2] : memref<128x128xf32, #tpu.memory_space<vmem>>, vector<128x128xf32>
    %cst = arith.constant dense<0.000000e+00> : vector<16x128xf32>
    %2 = tpu.matmul %0, %1, %cst {dimension_numbers = #tpu.dot_dimension_numbers<[1], [0], [0], [1], [0, 0, 1, 1], [], []>} : vector<16x128xf32>, vector<128x128xf32>, vector<16x128xf32> -> vector<16x128xf32>
    %c0_3 = arith.constant 0 : index
    %c0_4 = arith.constant 0 : index
    %3 = vector.load %arg3[%c0_3, %c0_4] : memref<1x128xf32, #tpu.memory_space<vmem>>, vector<1x128xf32>
    %4 = vector.broadcast %3 : vector<1x128xf32> to vector<16x128xf32>
    %5 = arith.addf %2, %4 : vector<16x128xf32>
    %c0_5 = arith.constant 0 : index
    %c0_6 = arith.constant 0 : index
    %6 = vector.load %arg4[%c0_5, %c0_6] : memref<16x128xf32, #tpu.memory_space<vmem>>, vector<16x128xf32>
    tpu.vector_store %arg4[%c0_5, %c0_6], %5 {strides = array<i32>} : memref<16x128xf32, #tpu.memory_space<vmem>>, vector<16x128xf32>,
    return
  }
  func.func @transform_0(%arg0: i32) -> (i32, i32) {
    %c0_i32 = arith.constant 0 : i32
    %c0_i32_0 = arith.constant 0 : i32
    return %arg0, %c0_i32 : i32, i32
  }
  func.func @transform_1(%arg0: i32) -> (i32, i32) {
    %c0_i32 = arith.constant 0 : i32
    %c0_i32_0 = arith.constant 0 : i32
    %c0_i32_1 = arith.constant 0 : i32
    return %c0_i32, %c0_i32_0 : i32, i32
  }
  func.func @transform_2(%arg0: i32) -> (i32, i32) {
    %c0_i32 = arith.constant 0 : i32
    %c0_i32_0 = arith.constant 0 : i32
    %c0_i32_1 = arith.constant 0 : i32
    return %c0_i32, %c0_i32_0 : i32, i32
  }
  func.func @transform_3(%arg0: i32) -> (i32, i32) {
    %c0_i32 = arith.constant 0 : i32
    %c0_i32_0 = arith.constant 0 : i32
    return %arg0, %c0_i32 : i32, i32
  }
}

</mosaic_0001>

<llo_original>
// kernel: tpu_custom_call.1
$region0: #{tpu_custom_call.1}
  #allocation0 [shape = 'u32[]', space=smem, size = 0x4, offset = 0x4, fixed_abs, tag = 'smem constant byte address 0x4 - core index']
  #allocation1 [shape = 'u32[72,128]{1,0:T(1,128)}', space=vmem, size = 0x9000, scoped, tag = 'internal scratch']
  %s0 = inlined_call_operand.hbm [shape: f32[16,128], index: 0, kind: input, shape index: {}]
  %s1 = inlined_call_operand.hbm [shape: f32[128,128], index: 1, kind: input, shape index: {}]
  %s2 = inlined_call_operand.vmem [shape: f32[1,128], index: 2, kind: input, shape index: {}]
  %s3 = inlined_call_operand.hbm [shape: f32[16,128], index: 3, kind: output, shape index: {}]
  %s4 = sld [smem:[#allocation0]]
  $region30: #{tpu_custom_call.1} parent=0
    _
  %s6 = ssub.s32 1, %s4
  %s7 = scalar_select 0, %s6, %s4
  $region1: #{tpu_custom_call.1} parent=0
    #allocation2 [shape = 'u8[8192]{0}', space=vmem, size = 0x2000, scoped, tag = 'input window, operand 0, single buffered']
    #allocation3 [shape = 's32[1]{0}', space=sflag, size = 0x4, scoped, tag = 'scoped memory for tpu_custom_call.1']
    #allocation4 [shape = 's32[1]{0}', space=sflag, size = 0x4, scoped, tag = 'scoped memory for tpu_custom_call.1']
    #allocation5 [shape = 'u8[65536]{0}', space=vmem, size = 0x10000, scoped, tag = 'input window, operand 1, single buffered']
    #allocation6 [shape = 's32[1]{0}', space=sflag, size = 0x4, scoped, tag = 'scoped memory for tpu_custom_call.1']
    #allocation7 [shape = 'u8[8192]{0}', space=vmem, size = 0x2000, scoped, tag = 'output window, operand 0, single buffered']
    %8 = vsyncpa [#allocation3], 0
    %9 = vsyncpa [#allocation6], 0
    %10 = vsyncpa [#allocation4], 0
    // Predicated region
    $region2: #{tpu_custom_call.1} parent=1 // pred_check
      _
    $region3: #{tpu_custom_call.1} parent=1 // pred_check_branch
      %12 = sbr.rel (0) target = $region5
    $region4: #{tpu_custom_call.1} parent=1 // pred_region
      %14 = vsyncadd [#allocation3], 0
      %s15 = sshll.u32 %s0, 4
      %s16 = int_to_ptr.hbm [resolvable:$true] %s15
      %s17 = sshll.u32 [#allocation2], 4
      %s18 = int_to_ptr.vmem [resolvable:$true] %s17
      %23 = dma.hbm_to_vmem [thread:$0]  %s16, 256, %s18, [#allocation3], 128, 128, 8
    $region5: #{tpu_custom_call.1} parent=1 // pred_fallthru
      _
    // Predicated region
    $region6: #{tpu_custom_call.1} parent=1 // pred_check
      _
    $region7: #{tpu_custom_call.1} parent=1 // pred_check_branch
      %25 = sbr.rel (0) target = $region9
    $region8: #{tpu_custom_call.1} parent=1 // pred_region
      %27 = vsyncadd [#allocation6], 0
      %s28 = sshll.u32 %s1, 4
      %s29 = int_to_ptr.hbm [resolvable:$true] %s28
      %s30 = sshll.u32 [#allocation5], 4
      %s31 = int_to_ptr.vmem [resolvable:$true] %s30
      %36 = dma.hbm_to_vmem [thread:$0]  %s29, 2048, %s31, [#allocation6], 128, 128, 8
    $region9: #{tpu_custom_call.1} parent=1 // pred_fallthru
      _
    // Predicated region
    $region10: #{tpu_custom_call.1} parent=1 // pred_check
      _
    $region11: #{tpu_custom_call.1} parent=1 // pred_check_branch
      %38 = sbr.rel (0) target = $region13
    $region12: #{tpu_custom_call.1} parent=1 // pred_region
      _
    $region13: #{tpu_custom_call.1} parent=1 // pred_fallthru
      _
    // Predicated region
    $region14: #{tpu_custom_call.1} parent=1 // pred_check
      _
    $region15: #{tpu_custom_call.1} parent=1 // pred_check_branch
      %40 = sbr.rel (0) target = $region17
    $region16: #{tpu_custom_call.1} parent=1 // pred_region
      %42 = dma.done [#allocation3], 256
    $region17: #{tpu_custom_call.1} parent=1 // pred_fallthru
      _
    // Predicated region
    $region18: #{tpu_custom_call.1} parent=1 // pred_check
      _
    $region19: #{tpu_custom_call.1} parent=1 // pred_check_branch
      %44 = sbr.rel (0) target = $region21
    $region20: #{tpu_custom_call.1} parent=1 // pred_region
      %46 = dma.done [#allocation6], 2048
    $region21: #{tpu_custom_call.1} parent=1 // pred_fallthru
      _
    %v47 = vld [vmem:[#allocation2] sm:$0xff]
    %v48 = vld [vmem:[#allocation2 + $0x8] sm:$0xff]
    %v49 = vld [vmem:[#allocation5] sm:$0xff]
    %v50 = vld [vmem:[#allocation5 + $0x8] sm:$0xff]
    %v51 = vld [vmem:[#allocation5 + $0x10] sm:$0xff]
    %v52 = vld [vmem:[#allocation5 + $0x18] sm:$0xff]
    %v53 = vld [vmem:[#allocation5 + $0x20] sm:$0xff]
    %v54 = vld [vmem:[#allocation5 + $0x28] sm:$0xff]
    %v55 = vld [vmem:[#allocation5 + $0x30] sm:$0xff]
    %v56 = vld [vmem:[#allocation5 + $0x38] sm:$0xff]
    %v57 = vld [vmem:[#allocation5 + $0x40] sm:$0xff]
    %v58 = vld [vmem:[#allocation5 + $0x48] sm:$0xff]
    %v59 = vld [vmem:[#allocation5 + $0x50] sm:$0xff]
    %v60 = vld [vmem:[#allocation5 + $0x58] sm:$0xff]
    %v61 = vld [vmem:[#allocation5 + $0x60] sm:$0xff]
    %v62 = vld [vmem:[#allocation5 + $0x68] sm:$0xff]
    %v63 = vld [vmem:[#allocation5 + $0x70] sm:$0xff]
    %v64 = vld [vmem:[#allocation5 + $0x78] sm:$0xff]
    %v65 = vld [vmem:[%s2] sm:$0x1]
    %v67 = vperm.slane %v65, 0
    %69 = vmatpush.msra.mxu0 %v64
    %70 = vmatpush.msra.mxu0 %v63
    %71 = vmatpush.msra.mxu0 %v62
    %72 = vmatpush.msra.mxu0 %v61
    %73 = vmatpush.msra.mxu0 %v60
    %74 = vmatpush.msra.mxu0 %v59
    %75 = vmatpush.msra.mxu0 %v58
    %76 = vmatpush.msra.mxu0 %v57
    %77 = vmatpush.msra.mxu0 %v56
    %78 = vmatpush.msra.mxu0 %v55
    %79 = vmatpush.msra.mxu0 %v54
    %80 = vmatpush.msra.mxu0 %v53
    %81 = vmatpush.msra.mxu0 %v52
    %82 = vmatpush.msra.mxu0 %v51
    %83 = vmatpush.msra.mxu0 %v50
    %84 = vmatpush.msra.mxu0 %v49
    %85 = vmatmul.f32.gmra.mxu0 %v47
    %v86 = vpop.f32.mrf.mxu0
    %v87 = vadd.f32 %v67, %v86
    %88 = vmatmul.f32.gmra.mxu0 %v48
    %v89 = vpop.f32.mrf.mxu0
    %v90 = vadd.f32 %v67, %v89
    %91 = vdwg.mxu0
    %92 = vst [vmem:[#allocation7] sm:$0xff] %v87
    %93 = vst [vmem:[#allocation7 + $0x8] sm:$0xff] %v90
    // Predicated region
    $region22: #{tpu_custom_call.1} parent=1 // pred_check
      _
    $region23: #{tpu_custom_call.1} parent=1 // pred_check_branch
      %95 = sbr.rel (0) target = $region25
    $region24: #{tpu_custom_call.1} parent=1 // pred_region
      %97 = vsyncadd [#allocation4], 0
      %s98 = sshll.u32 [#allocation7], 4
      %s99 = int_to_ptr.vmem [resolvable:$true] %s98
      %s100 = sshll.u32 %s3, 4
      %s101 = int_to_ptr.hbm [resolvable:$true] %s100
      %106 = dma.vmem_to_hbm [thread:$0]  %s99, 256, %s101, [#allocation4], 128, 128, 8
    $region25: #{tpu_custom_call.1} parent=1 // pred_fallthru
      _
    // Predicated region
    $region26: #{tpu_custom_call.1} parent=1 // pred_check
      _
    $region27: #{tpu_custom_call.1} parent=1 // pred_check_branch
      %108 = sbr.rel (0) target = $region29
    $region28: #{tpu_custom_call.1} parent=1 // pred_region
      %110 = dma.done [#allocation4], 256
    $region29: #{tpu_custom_call.1} parent=1 // pred_fallthru
      _
    %111 = vsyncpa [#allocation3], 1
    %112 = vsyncpa [#allocation6], 1
    %113 = vsyncpa [#allocation4], 1

</llo_original>
